<compile_context>
chip_gen: v7x
topology: tpu7x:2x2x1
jax: 0.10.0
libtpu: 0.0.40
codegen_flags: <defaults>
</compile_context>

<pallas_src>
import functools
import math

import numpy as np
import jax
import jax.numpy as jnp
from jax.experimental import pallas as pl
from jax.experimental.pallas import tpu as pltpu


# ----------------------------- Pallas kernel ------------------------------ #
def _spectrogram_kernel(frames_ref, basis_ref, out_ref):
    # frames_ref: (tm, K_pad)       tile of frames (window already folded away)
    # basis_ref:  (K_pad, 2*F_pad)  [ diag(w)@cos | -diag(w)@sin ], zero-padded
    # out_ref:    (tm, F_pad)       power spectrum tile (|X|^2)
    y = jnp.dot(frames_ref[...], basis_ref[...],
                preferred_element_type=jnp.float32)      # single MXU matmul
    fpad = out_ref.shape[-1]
    re = y[:, :fpad]          # static slices at a 128-multiple boundary
    im = y[:, fpad:]
    out_ref[...] = re * re + im * im                     # VPU


def _round_up(x, m):
    return ((x + m - 1) // m) * m


def _pick_tm(M, max_tm=512):
    """Row tile: large for MXU utilization, but keep >= 2 grid steps (v7x)."""
    tm = min(max_tm, _round_up(M, 8))
    if M > 8 and pl.cdiv(M, tm) < 2:
        tm = max(8, _round_up(pl.cdiv(M, 2), 8))
    return tm


def _spectrogram_pallas(frames, basis, n_freq_pad, *, tm):
    """frames: (M, K_pad) -> power spectrum (M, F_pad)."""
    M, k_pad = frames.shape
    return pl.pallas_call(
        _spectrogram_kernel,
        out_shape=jax.ShapeDtypeStruct((M, n_freq_pad), jnp.float32),
        grid_spec=pltpu.PrefetchScalarGridSpec(
            num_scalar_prefetch=0,
            grid=(pl.cdiv(M, tm),),
            in_specs=[
                pl.BlockSpec((tm, k_pad), lambda i: (i, 0)),
                pl.BlockSpec((k_pad, 2 * n_freq_pad), lambda i: (0, 0)),
            ],
            out_specs=pl.BlockSpec((tm, n_freq_pad), lambda i: (i, 0)),
        ),
        compiler_params=pltpu.CompilerParams(
            dimension_semantics=("parallel",),
        ),
    )(frames, basis)


# ------------------------------ module glue ------------------------------- #
class SpectrogramPallas:
    """JAX/Pallas port of torch_ecg Spectrogram (power spectrogram path)."""

    def __init__(self, n_fft=400, win_length=None, hop_length=None, pad=0,
                 power=2.0, normalized=False, center=True, pad_mode="reflect",
                 onesided=True, use_bf16=False):
        assert power is not None, "complex-output path not implemented"
        assert onesided, "onesided=False not implemented"
        self.n_fft = n_fft
        self.win_length = win_length if win_length is not None else n_fft
        self.hop_length = (hop_length if hop_length is not None
                           else self.win_length // 2)
        self.pad = pad
        self.power = float(power)
        self.normalized = normalized
        self.center = center
        self.pad_mode = pad_mode
        self.n_freq = n_fft // 2 + 1
        self.use_bf16 = use_bf16

        # Padding of the contraction (K) and frequency (lane) dims.
        if n_fft % 128 == 0 or n_fft <= 128:
            # Already clean, or so small that inflating K would only add
            # bandwidth (the BlockSpec K dim equals the full array dim anyway).
            self.n_fft_pad = _round_up(n_fft, 8)
        else:
            self.n_fft_pad = _round_up(n_fft, 128)
        self.n_freq_pad = _round_up(self.n_freq, 128)

        # --- window: hann (periodic), float64 on host ---------------------
        nw = np.arange(self.win_length, dtype=np.float64)
        w = 0.5 * (1.0 - np.cos(2.0 * np.pi * nw / self.win_length))
        self.window_norm = float(np.sqrt(np.sum(w * w)))
        if self.win_length < n_fft:           # torch.stft centers the window
            left = (n_fft - self.win_length) // 2
            w = np.pad(w, (left, n_fft - self.win_length - left))

        # --- window-folded real-DFT bases (exact int mod, float64) --------
        # X[f] = sum_n x[n]*w[n]*exp(-2*pi*i*f*n/n_fft)
        n = np.arange(n_fft, dtype=np.int64)[:, None]
        f = np.arange(self.n_freq, dtype=np.int64)[None, :]
        k = (n * f) % n_fft                   # exact; avoids f32 angle blow-up
        ang = 2.0 * np.pi * k.astype(np.float64) / n_fft
        cosb = w[:, None] * np.cos(ang)
        sinb = -(w[:, None] * np.sin(ang))

        basis = np.zeros((self.n_fft_pad, 2 * self.n_freq_pad), np.float64)
        basis[:n_fft, :self.n_freq] = cosb
        basis[:n_fft, self.n_freq_pad:self.n_freq_pad + self.n_freq] = sinb
        bdtype = jnp.bfloat16 if use_bf16 else jnp.float32
        self.basis = jnp.asarray(basis, dtype=bdtype)

    @functools.partial(jax.jit, static_argnums=0)
    def __call__(self, waveform):
        x = waveform.astype(jnp.float32)
        if self.pad > 0:
            x = jnp.pad(x, [(0, 0)] * (x.ndim - 1) + [(self.pad, self.pad)])
        batch_shape = x.shape[:-1]
        T = x.shape[-1]
        x2d = x.reshape(-1, T)

        # center padding (reflect), as torch.stft(center=True, pad_mode=...)
        if self.center:
            p = self.n_fft // 2
            x2d = jnp.pad(x2d, ((0, 0), (p, p)), mode=self.pad_mode)

        Tp = x2d.shape[-1]
        n_frames = 1 + (Tp - self.n_fft) // self.hop_length

        # Widen the gather window to n_fft_pad.  The trailing columns contain
        # neighbouring samples / zeros, but they multiply the zero rows of the
        # padded basis, so no extra zeroing / padding pass is needed.
        extra = self.n_fft_pad - self.n_fft
        if extra > 0:
            x2d = jnp.pad(x2d, ((0, 0), (0, extra)))

        idx = (self.hop_length * jnp.arange(n_frames)[:, None]
               + jnp.arange(self.n_fft_pad)[None, :])
        frames = x2d[:, idx]                      # (B, n_frames, K_pad)
        B = frames.shape[0]
        M = B * n_frames
        frames = frames.reshape(M, self.n_fft_pad)
        if self.use_bf16:
            frames = frames.astype(jnp.bfloat16)

        # hot path: fused (windowed) DFT matmul + |.|^2 in Pallas
        power2 = _spectrogram_pallas(frames, self.basis, self.n_freq_pad,
                                     tm=_pick_tm(M))

        spec = power2[:, :self.n_freq]            # drop lane padding
        spec = spec.reshape(B, n_frames, self.n_freq)
        spec = jnp.swapaxes(spec, -1, -2)         # (B, freq, n_frames)
        spec = spec.reshape(batch_shape + (self.n_freq, n_frames))

        if self.normalized:
            # torch normalizes the complex stft by sqrt(sum(w^2)); power=2
            # output therefore scales by 1/sum(w^2).
            spec = spec / (self.window_norm ** 2)
        if self.power != 2.0:
            # kernel produces |X|^2; convert: |X|^p = (|X|^2)^(p/2)
            spec = spec ** (self.power / 2.0)
        return spec


if __name__ == "__main__":
    key = jax.random.PRNGKey(0)
    # small shapes: batch=2, channels=4, time=128; n_fft=16 -> freq=9, frames=17
    x = jax.random.normal(key, (2, 4, 128), dtype=jnp.float32)

    module = SpectrogramPallas(n_fft=16, win_length=16, hop_length=8,
                               pad=0, power=2.0, normalized=False,
                               center=True, pad_mode="reflect", onesided=True)
    out = jax.block_until_ready(module(x))

    assert out.shape == (2, 4, 9, 17), out.shape
    assert out.dtype == jnp.float32

    # sanity check against a pure-JAX reference of the same math
    def ref(xx):
        p = module.n_fft // 2
        x2d = xx.reshape(-1, xx.shape[-1])
        x2d = jnp.pad(x2d, ((0, 0), (p, p)), mode="reflect")
        n_frames = 1 + (x2d.shape[-1] - module.n_fft) // module.hop_length
        idx = (module.hop_length * jnp.arange(n_frames)[:, None]
               + jnp.arange(module.n_fft)[None, :])
        nw = jnp.arange(module.win_length, dtype=jnp.float32)
        w = 0.5 * (1.0 - jnp.cos(2.0 * math.pi * nw / module.win_length))
        fr = x2d[:, idx] * w[None, None, :]
        n = jnp.arange(module.n_fft, dtype=jnp.float32)[:, None]
        f = jnp.arange(module.n_freq, dtype=jnp.float32)[None, :]
        ang = 2.0 * math.pi * n * f / module.n_fft
        re = fr @ jnp.cos(ang)
        im = fr @ (-jnp.sin(ang))
        s = re * re + im * im
        return jnp.swapaxes(s, -1, -2).reshape(
            xx.shape[:-1] + (module.n_freq, n_frames))

    ref_out = ref(x)
    assert jnp.allclose(out, ref_out, rtol=1e-3, atol=1e-3), (
        float(jnp.max(jnp.abs(out - ref_out))))

    print("KERNEL_OK")
</pallas_src>

<mosaic_0001>
module attributes {stable_mosaic.version = 11 : i64} {
  func.func @_spectrogram_kernel(%arg0: i32, %arg1: memref<72x16xf32, #tpu.memory_space<vmem>>, %arg2: memref<16x256xf32, #tpu.memory_space<vmem>>, %arg3: memref<72x128xf32, #tpu.memory_space<vmem>>) attributes {dimension_semantics = [#tpu.dimension_semantics<parallel>], iteration_bounds = array<i64: 2>, scalar_prefetch = 0 : i64, scratch_operands = 0 : i64, tpu.core_type = #tpu.core_type<tc>, window_params = [{transform_indices = @transform_0, window_bounds = array<i64: 72, 16>}, {pipeline_mode = #tpu.pipeline_mode<synchronous>, transform_indices = @transform_1, window_bounds = array<i64: 16, 256>}, {transform_indices = @transform_2, window_bounds = array<i64: 72, 128>}]} {
    %c0 = arith.constant 0 : index
    %c0_0 = arith.constant 0 : index
    %0 = vector.load %arg1[%c0, %c0_0] : memref<72x16xf32, #tpu.memory_space<vmem>>, vector<72x16xf32>
    %c0_1 = arith.constant 0 : index
    %c0_2 = arith.constant 0 : index
    %1 = vector.load %arg2[%c0_1, %c0_2] : memref<16x256xf32, #tpu.memory_space<vmem>>, vector<16x256xf32>
    %cst = arith.constant dense<0.000000e+00> : vector<72x256xf32>
    %2 = tpu.matmul %0, %1, %cst {dimension_numbers = #tpu.dot_dimension_numbers<[1], [0], [0], [1], [0, 0, 1, 1], [], []>} : vector<72x16xf32>, vector<16x256xf32>, vector<72x256xf32> -> vector<72x256xf32>
    %3 = vector.extract_strided_slice %2 {offsets = [0, 0], sizes = [72, 128], strides = [1, 1]} : vector<72x256xf32> to vector<72x128xf32>
    %4 = vector.extract_strided_slice %2 {offsets = [0, 128], sizes = [72, 128], strides = [1, 1]} : vector<72x256xf32> to vector<72x128xf32>
    %5 = arith.mulf %3, %3 : vector<72x128xf32>
    %6 = arith.mulf %4, %4 : vector<72x128xf32>
    %7 = arith.addf %5, %6 : vector<72x128xf32>
    %c0_3 = arith.constant 0 : index
    %c0_4 = arith.constant 0 : index
    %8 = vector.load %arg3[%c0_3, %c0_4] : memref<72x128xf32, #tpu.memory_space<vmem>>, vector<72x128xf32>
    tpu.vector_store %arg3[%c0_3, %c0_4], %7 {strides = array<i32>} : memref<72x128xf32, #tpu.memory_space<vmem>>, vector<72x128xf32>,
    return
  }
  func.func @transform_0(%arg0: i32) -> (i32, i32) {
    %c0_i32 = arith.constant 0 : i32
    %c0_i32_0 = arith.constant 0 : i32
    return %arg0, %c0_i32 : i32, i32
  }
  func.func @transform_1(%arg0: i32) -> (i32, i32) {
    %c0_i32 = arith.constant 0 : i32
    %c0_i32_0 = arith.constant 0 : i32
    %c0_i32_1 = arith.constant 0 : i32
    return %c0_i32, %c0_i32_0 : i32, i32
  }
  func.func @transform_2(%arg0: i32) -> (i32, i32) {
    %c0_i32 = arith.constant 0 : i32
    %c0_i32_0 = arith.constant 0 : i32
    return %arg0, %c0_i32 : i32, i32
  }
}

</mosaic_0001>

<llo_original>
// kernel: a_call__.1
$region0: #{a_call__.1}
  #allocation0 [shape = 'u32[]', space=smem, size = 0x4, offset = 0x4, fixed_abs, tag = 'smem constant byte address 0x4 - core index']
  #allocation1 [shape = 'u32[144,128]{1,0:T(1,128)}', space=vmem, size = 0x12000, scoped, tag = 'internal scratch']
  %s0 = inlined_call_operand.vmem [shape: f32[136,16], index: 0, kind: input, shape index: {}]
  %s1 = inlined_call_operand.vmem [shape: f32[16,256], index: 1, kind: input, shape index: {}]
  %s2 = inlined_call_operand.vmem [shape: f32[136,128], index: 2, kind: output, shape index: {}]
  %s3 = sld [smem:[#allocation0]]
  $region89: #{a_call__.1} parent=0
    _
  %s5 = ssub.s32 1, %s3
  %s6 = scalar_select 0, %s5, %s3
  $region1: #{a_call__.1} parent=0
    #allocation2 [shape = 'u8[73728]{0}', space=vmem, size = 0x12000, scoped, tag = 'output window, operand 0']
    loop: start=0, step=1, limit=4
    $region2: #{a_call__.1} parent=1 // loop_pre_header
      _
    $region3: #{a_call__.1} parent=1 // loop_header
      %s8 = sphi 0, %s12
      %p9 = scmp.ge.s32.totalorder %s8, 4
      %s18 = sphi 0, %s20
      %s21 = sphi 0, %s18
      %s22 = sphi 0, %s21
      %s38 = sphi 0, %s22
      %s42 = sphi 0, %s42
      %s44 = sphi 0, %s42
      %s45 = sphi 0, %s44
      %s59 = sphi 0, %s45
      %s65 = sphi 0, %s67
      %s68 = sphi 0, %s65
      %s69 = sphi 0, %s68
      %s85 = sphi 0, %s69
    $region4: #{a_call__.1} parent=1 // loop_header_branch
      %11 = sbr.rel (%p9) target = $region8
    $region5: #{a_call__.1} parent=1 // loop_body
      %s13 = ssub.s32 %s8, 1
      %s14 = ssub.s32 %s8, 2
      %s15 = sadd.s32 %s8, 1
      %s16 = ssub.s32 %s8, %s15
      %p17 = scmp.eq.s32.totalorder %s16, 0
      %s19 = sadd.s32 %s18, 1
      %s20 = scalar_select %p17, %s18, %s19
      %p23 = pneg %p17
      %p24 = scmp.eq.s32.totalorder %s8, 1
      %p25 = por %p23, %p24
      %p26 = scmp.ne.s32.totalorder %s18, %s21
      %p27 = scmp.eq.s32.totalorder %s8, 0
      %p28 = por %p26, %p27
      %p29 = scmp.ne.s32.totalorder %s18, %s21
      %p30 = scmp.eq.s32.totalorder %s13, 1
      %p31 = por %p29, %p30
      %p32 = scmp.ne.s32.totalorder %s21, %s22
      %p33 = scmp.eq.s32.totalorder %s13, 0
      %p34 = por %p32, %p33
      %p35 = scmp.ne.s32.totalorder %s21, %s22
      %p36 = scmp.eq.s32.totalorder %s14, 1
      %p37 = por %p35, %p36
      %p39 = scmp.ne.s32.totalorder %s22, %s38
      %p40 = scmp.eq.s32.totalorder %s14, 0
      %p41 = por %p39, %p40
      %s43 = sadd.s32 %s42, 1
      %p46 = scmp.eq.s32.totalorder %s8, 1
      %p47 = scmp.ne.s32.totalorder %s42, %s44
      %p48 = scmp.eq.s32.totalorder %s8, 0
      %p49 = por %p47, %p48
      %p50 = scmp.ne.s32.totalorder %s42, %s44
      %p51 = scmp.eq.s32.totalorder %s13, 1
      %p52 = por %p50, %p51
      %p53 = scmp.ne.s32.totalorder %s44, %s45
      %p54 = scmp.eq.s32.totalorder %s13, 0
      %p55 = por %p53, %p54
      %p56 = scmp.ne.s32.totalorder %s44, %s45
      %p57 = scmp.eq.s32.totalorder %s14, 1
      %p58 = por %p56, %p57
      %p60 = scmp.ne.s32.totalorder %s45, %s59
      %p61 = scmp.eq.s32.totalorder %s14, 0
      %p62 = por %p60, %p61
      %s63 = ssub.s32 %s8, %s15
      %p64 = scmp.eq.s32.totalorder %s63, 0
      %s66 = sadd.s32 %s65, 1
      %s67 = scalar_select %p64, %s65, %s66
      %p70 = pneg %p64
      %p71 = scmp.eq.s32.totalorder %s8, 1
      %p72 = por %p70, %p71
      %p73 = scmp.ne.s32.totalorder %s65, %s68
      %p74 = scmp.eq.s32.totalorder %s8, 0
      %p75 = por %p73, %p74
      %p76 = scmp.ne.s32.totalorder %s65, %s68
      %p77 = scmp.eq.s32.totalorder %s13, 1
      %p78 = por %p76, %p77
      %p79 = scmp.ne.s32.totalorder %s68, %s69
      %p80 = scmp.eq.s32.totalorder %s13, 0
      %p81 = por %p79, %p80
      %p82 = scmp.ne.s32.totalorder %s68, %s69
      %p83 = scmp.eq.s32.totalorder %s14, 1
      %p84 = por %p82, %p83
      %p86 = scmp.ne.s32.totalorder %s69, %s85
      %p87 = scmp.eq.s32.totalorder %s14, 0
      %p88 = por %p86, %p87
      %p89 = scmp.le.s32.totalorder 1, %s8
      %p90 = scmp.lt.s32.totalorder %s8, 3
      %p91 = pnand %p89, %p90
      %p92 = pneg %p91
      // Predicated region
      $region9: #{a_call__.1} parent=5 // pred_check
        _
      $region10: #{a_call__.1} parent=5 // pred_check_branch
        %94 = sbr.rel (%p91) target = $region12
      $region11: #{a_call__.1} parent=5 // pred_region
        %s95 = ssub.s32 %s8, 1
        // Predicated region
        $region13: #{a_call__.1} parent=11 // pred_check
          %p96 = pneg %p55
        $region14: #{a_call__.1} parent=11 // pred_check_branch
          %98 = sbr.rel (%p96) target = $region16
        $region15: #{a_call__.1} parent=11 // pred_region
          _
        $region16: #{a_call__.1} parent=11 // pred_fallthru
          _
      $region12: #{a_call__.1} parent=5 // pred_fallthru
        _
      %p99 = scmp.lt.s32.totalorder %s8, 2
      // Predicated region
      $region17: #{a_call__.1} parent=5 // pred_check
        %p100 = pneg %p99
      $region18: #{a_call__.1} parent=5 // pred_check_branch
        %102 = sbr.rel (%p100) target = $region20
      $region19: #{a_call__.1} parent=5 // pred_region
        // Predicated region
        $region21: #{a_call__.1} parent=19 // pred_check
          %p103 = pneg %p28
        $region22: #{a_call__.1} parent=19 // pred_check_branch
          %105 = sbr.rel (%p103) target = $region24
        $region23: #{a_call__.1} parent=19 // pred_region
          %s106 = smul.u32 9, %s8
          %s107 = ssub.s32 17, %s106
          %p108 = scmp.lt.s32.totalorder %s107, 9
          %s109 = scalar_select %p108, %s107, 9
          %s110 = smul.u32 128, %s109
          %p111 = scmp.lt.s32.totalorder %s106, 16
          %s112 = scalar_select %p111, %s106, 16
          %s113 = smul.addr %s112, 8
          %s114 = scalar_lea.vmem %s0, %s113
          %s115 = smul.u32 9, %s8
          %s116 = ssub.s32 17, %s115
          %p117 = scmp.lt.s32.totalorder %s116, 9
          %s118 = scalar_select %p117, %s116, 9
          %s119 = smul.u32 128, %s118
        $region24: #{a_call__.1} parent=19 // pred_fallthru
          _
      $region20: #{a_call__.1} parent=5 // pred_fallthru
        _
      %p120 = scmp.le.s32.totalorder 1, %s8
      %p121 = scmp.lt.s32.totalorder %s8, 3
      %p122 = pnand %p120, %p121
      %p123 = pneg %p122
      // Predicated region
      $region25: #{a_call__.1} parent=5 // pred_check
        _
      $region26: #{a_call__.1} parent=5 // pred_check_branch
        %125 = sbr.rel (%p122) target = $region28
      $region27: #{a_call__.1} parent=5 // pred_region
        %s126 = ssub.s32 %s8, 1
        %s127 = smul.u32 9, %s13
        %s128 = ssub.s32 17, %s127
        %p129 = scmp.lt.s32.totalorder %s128, 9
        %s130 = scalar_select %p129, %s128, 9
        %s131 = smul.u32 128, %s130
        %p132 = scmp.lt.s32.totalorder %s127, 16
        %s133 = scalar_select %p132, %s127, 16
        %s134 = smul.addr %s133, 8
        %s135 = scalar_lea.vmem %s0, %s134
        %p136 = pneg %p34
        %p137 = pneg %p31
        %p138 = pneg %p55
        %p139 = pneg %p52
        %p140 = pneg %p81
        %p141 = pneg %p78
        %s142 = sand.u32 %s68, 1
        %s143 = sand.u32 %s68, 1
        %s144 = smul.addr %s143, 72
        %s145 = scalar_lea.vmem [#allocation2], %s144
        %s146 = smul.u32 9, %s13
        %s147 = ssub.s32 17, %s146
        %p148 = scmp.lt.s32.totalorder %s147, 9
        %s149 = scalar_select %p148, %s147, 9
        %s150 = smul.u32 128, %s149
        %p151 = scmp.lt.s32.totalorder %s146, 16
        %s152 = scalar_select %p151, %s146, 16
        %s153 = smul.addr %s152, 8
        %s154 = scalar_lea.vmem %s0, %s153
        %s155 = smul.u32 9, %s13
        %s156 = ssub.s32 17, %s155
        %p157 = scmp.lt.s32.totalorder %s156, 9
        %s158 = scalar_select %p157, %s156, 9
        %s159 = smul.u32 128, %s158
        %s160 = smul.u32 9, %s13
        %s161 = ssub.s32 17, %s160
        %p162 = scmp.lt.s32.totalorder %s161, 9
        %s163 = scalar_select %p162, %s161, 9
        %s164 = smul.u32 128, %s163
        %v165 = vld [vmem:[%s154] sm:$0xff]
        %v166 = vld [vmem:[%s154 + $0x8] sm:$0xff]
        %v167 = vld [vmem:[%s154 + $0x10] sm:$0xff]
        %v168 = vld [vmem:[%s154 + $0x18] sm:$0xff]
        %v169 = vld [vmem:[%s154 + $0x20] sm:$0xff]
        %v170 = vld [vmem:[%s154 + $0x28] sm:$0xff]
        %v171 = vld [vmem:[%s154 + $0x30] sm:$0xff]
        %v172 = vld [vmem:[%s154 + $0x38] sm:$0xff]
        %v173 = vld [vmem:[%s154 + $0x40] sm:$0xff]
        %v174 = vld [vmem:[%s1] sm:$0xff]
        %v175 = vld [vmem:[%s1 + $0x8] sm:$0xff]
        %v176 = vld [vmem:[%s1 + $0x10] sm:$0xff]
        %v177 = vld [vmem:[%s1 + $0x18] sm:$0xff]
        %vm178 = vcmask 130048
        %v180 = vsel %vm178, %v165, 0
        %v183 = vsel %vm178, %v166, 0
        %v186 = vsel %vm178, %v167, 0
        %v189 = vsel %vm178, %v168, 0
        %v192 = vsel %vm178, %v169, 0
        %v195 = vsel %vm178, %v170, 0
        %v198 = vsel %vm178, %v171, 0
        %v201 = vsel %vm178, %v172, 0
        %v204 = vsel %vm178, %v173, 0
        %206 = vmatprep.subr.mxu0 %v175
        %207 = vmatpush1.msra.mxu0 %v174
        %208 = vmatprep.subr.mxu0 %v177
        %209 = vmatpush1.msra.mxu0 %v176
        %210 = vmatprep.subr.mxu0 0.0
        %211 = vmatpush1.msra.mxu0 0.0
        %212 = vmatprep.subr.mxu0 0.0
        %213 = vmatpush1.msra.mxu0 0.0
        %214 = vmatprep.subr.mxu0 0.0
        %215 = vmatpush1.msra.mxu0 0.0
        %216 = vmatprep.subr.mxu0 0.0
        %217 = vmatpush1.msra.mxu0 0.0
        %218 = vmatprep.subr.mxu0 0.0
        %219 = vmatpush1.msra.mxu0 0.0
        %220 = vmatprep.subr.mxu0 0.0
        %221 = vmatpush1.msra.mxu0 0.0
        %222 = vmatprep.subr.mxu0 0.0
        %223 = vmatpush1.msra.mxu0 0.0
        %224 = vmatprep.subr.mxu0 0.0
        %225 = vmatpush1.msra.mxu0 0.0
        %226 = vmatprep.subr.mxu0 0.0
        %227 = vmatpush1.msra.mxu0 0.0
        %228 = vmatprep.subr.mxu0 0.0
        %229 = vmatpush1.msra.mxu0 0.0
        %230 = vmatprep.subr.mxu0 0.0
        %231 = vmatpush1.msra.mxu0 0.0
        %232 = vmatprep.subr.mxu0 0.0
        %233 = vmatpush1.msra.mxu0 0.0
        %234 = vmatprep.subr.mxu0 0.0
        %235 = vmatpush1.msra.mxu0 0.0
        %236 = vmatprep.subr.mxu0 0.0
        %237 = vmatpush1.msra.mxu0 0.0
        %238 = vmatprep.subr.mxu0 0.0
        %239 = vmatpush1.msra.mxu0 0.0
        %240 = vmatprep.subr.mxu0 0.0
        %241 = vmatpush1.msra.mxu0 0.0
        %242 = vmatprep.subr.mxu0 0.0
        %243 = vmatpush1.msra.mxu0 0.0
        %244 = vmatprep.subr.mxu0 0.0
        %245 = vmatpush1.msra.mxu0 0.0
        %246 = vmatprep.subr.mxu0 0.0
        %247 = vmatpush1.msra.mxu0 0.0
        %248 = vmatprep.subr.mxu0 0.0
        %249 = vmatpush1.msra.mxu0 0.0
        %250 = vmatprep.subr.mxu0 0.0
        %251 = vmatpush1.msra.mxu0 0.0
        %252 = vmatprep.subr.mxu0 0.0
        %253 = vmatpush1.msra.mxu0 0.0
        %254 = vmatprep.subr.mxu0 0.0
        %255 = vmatpush1.msra.mxu0 0.0
        %256 = vmatprep.subr.mxu0 0.0
        %257 = vmatpush1.msra.mxu0 0.0
        %258 = vmatprep.subr.mxu0 0.0
        %259 = vmatpush1.msra.mxu0 0.0
        %260 = vmatprep.subr.mxu0 0.0
        %261 = vmatpush1.msra.mxu0 0.0
        %262 = vmatprep.subr.mxu0 0.0
        %263 = vmatpush1.msra.mxu0 0.0
        %264 = vmatprep.subr.mxu0 0.0
        %265 = vmatpush1.msra.mxu0 0.0
        %266 = vmatprep.subr.mxu0 0.0
        %267 = vmatpush1.msra.mxu0 0.0
        %268 = vmatprep.subr.mxu0 0.0
        %269 = vmatpush1.msra.mxu0 0.0
        %270 = vmatprep.mubr.f32.mxu0 0.0
        %271 = vmatmul.mubr.f32.gmra.mrb[0].mxu0 %v180
        %v272 = vpop.f32.mrb[0].mxu0
        %v273 = vadd.f32 0.0, %v272
        %v274 = vpop.f32.mrb[0].mxu0
        %v275 = vadd.f32 0.0, %v274
        %276 = vmatprep.mubr.f32.mxu0 0.0
        %277 = vmatmul.mubr.f32.gmra.mrb[0].mxu0 %v183
        %v278 = vpop.f32.mrb[0].mxu0
        %v279 = vadd.f32 0.0, %v278
        %v280 = vpop.f32.mrb[0].mxu0
        %v281 = vadd.f32 0.0, %v280
        %282 = vmatprep.mubr.f32.mxu0 0.0
        %283 = vmatmul.mubr.f32.gmra.mrb[0].mxu0 %v186
        %v284 = vpop.f32.mrb[0].mxu0
        %v285 = vadd.f32 0.0, %v284
        %v286 = vpop.f32.mrb[0].mxu0
        %v287 = vadd.f32 0.0, %v286
        %288 = vmatprep.mubr.f32.mxu0 0.0
        %289 = vmatmul.mubr.f32.gmra.mrb[0].mxu0 %v189
        %v290 = vpop.f32.mrb[0].mxu0
        %v291 = vadd.f32 0.0, %v290
        %v292 = vpop.f32.mrb[0].mxu0
        %v293 = vadd.f32 0.0, %v292
        %294 = vmatprep.mubr.f32.mxu0 0.0
        %295 = vmatmul.mubr.f32.gmra.mrb[0].mxu0 %v192
        %v296 = vpop.f32.mrb[0].mxu0
        %v297 = vadd.f32 0.0, %v296
        %v298 = vpop.f32.mrb[0].mxu0
        %v299 = vadd.f32 0.0, %v298
        %300 = vmatprep.mubr.f32.mxu0 0.0
        %301 = vmatmul.mubr.f32.gmra.mrb[0].mxu0 %v195
        %v302 = vpop.f32.mrb[0].mxu0
        %v303 = vadd.f32 0.0, %v302
        %v304 = vpop.f32.mrb[0].mxu0
        %v305 = vadd.f32 0.0, %v304
        %306 = vmatprep.mubr.f32.mxu0 0.0
        %307 = vmatmul.mubr.f32.gmra.mrb[0].mxu0 %v198
        %v308 = vpop.f32.mrb[0].mxu0
        %v309 = vadd.f32 0.0, %v308
        %v310 = vpop.f32.mrb[0].mxu0
        %v311 = vadd.f32 0.0, %v310
        %312 = vmatprep.mubr.f32.mxu0 0.0
        %313 = vmatmul.mubr.f32.gmra.mrb[0].mxu0 %v201
        %v314 = vpop.f32.mrb[0].mxu0
        %v315 = vadd.f32 0.0, %v314
        %v316 = vpop.f32.mrb[0].mxu0
        %v317 = vadd.f32 0.0, %v316
        %318 = vmatprep.mubr.f32.mxu0 0.0
        %319 = vmatmul.mubr.f32.gmra.mrb[0].mxu0 %v204
        %v320 = vpop.f32.mrb[0].mxu0
        %v321 = vadd.f32 0.0, %v320
        %v322 = vpop.f32.mrb[0].mxu0
        %v323 = vadd.f32 0.0, %v322
        %324 = vdwg.mxu0
        %v325 = vmul.f32 %v273, %v273
        %v326 = vmul.f32 %v279, %v279
        %v327 = vmul.f32 %v285, %v285
        %v328 = vmul.f32 %v291, %v291
        %v329 = vmul.f32 %v297, %v297
        %v330 = vmul.f32 %v303, %v303
        %v331 = vmul.f32 %v309, %v309
        %v332 = vmul.f32 %v315, %v315
        %v333 = vmul.f32 %v321, %v321
        %v334 = vmul.f32 %v275, %v275
        %v335 = vmul.f32 %v281, %v281
        %v336 = vmul.f32 %v287, %v287
        %v337 = vmul.f32 %v293, %v293
        %v338 = vmul.f32 %v299, %v299
        %v339 = vmul.f32 %v305, %v305
        %v340 = vmul.f32 %v311, %v311
        %v341 = vmul.f32 %v317, %v317
        %v342 = vmul.f32 %v323, %v323
        %v343 = vadd.f32 %v325, %v334
        %v344 = vadd.f32 %v326, %v335
        %v345 = vadd.f32 %v327, %v336
        %v346 = vadd.f32 %v328, %v337
        %v347 = vadd.f32 %v329, %v338
        %v348 = vadd.f32 %v330, %v339
        %v349 = vadd.f32 %v331, %v340
        %v350 = vadd.f32 %v332, %v341
        %v351 = vadd.f32 %v333, %v342
        %352 = vst [vmem:[%s145] sm:$0xff] %v343
        %353 = vst [vmem:[%s145 + $0x8] sm:$0xff] %v344
        %354 = vst [vmem:[%s145 + $0x10] sm:$0xff] %v345
        %355 = vst [vmem:[%s145 + $0x18] sm:$0xff] %v346
        %356 = vst [vmem:[%s145 + $0x20] sm:$0xff] %v347
        %357 = vst [vmem:[%s145 + $0x28] sm:$0xff] %v348
        %358 = vst [vmem:[%s145 + $0x30] sm:$0xff] %v349
        %359 = vst [vmem:[%s145 + $0x38] sm:$0xff] %v350
        %360 = vst [vmem:[%s145 + $0x40] sm:$0xff] %v351
        %s361 = sand.u32 %s68, 1
        %s362 = sand.u32 %s68, 1
        %s363 = smul.addr %s362, 72
        %s364 = scalar_lea.vmem [#allocation2], %s363
        // Predicated region
        $region29: #{a_call__.1} parent=27 // pred_check
          %p365 = pneg %p78
        $region30: #{a_call__.1} parent=27 // pred_check_branch
          %367 = sbr.rel (%p365) target = $region32
        $region31: #{a_call__.1} parent=27 // pred_region
          %s368 = smul.u32 9, %s13
          %s369 = ssub.s32 17, %s368
          %p370 = scmp.lt.s32.totalorder %s369, 9
          %s371 = scalar_select %p370, %s369, 9
          %s372 = smul.u32 128, %s371
          %p373 = scmp.ne.s32.totalorder 0, %s372
          %s374 = smul.addr %s368, 8
          %s375 = scalar_lea.vmem %s2, %s374
          // Predicated region
          $region33: #{a_call__.1} parent=31 // pred_check
            %p376 = pneg %p373
          $region34: #{a_call__.1} parent=31 // pred_check_branch
            %378 = sbr.rel (%p376) target = $region36
          $region35: #{a_call__.1} parent=31 // pred_region
            // Predicated region
            $region37: #{a_call__.1} parent=35 // pred_check
              _
            $region38: #{a_call__.1} parent=35 // pred_check_branch
              %380 = sbr.rel (0) target = $region40
            $region39: #{a_call__.1} parent=35 // pred_region
              // Predicated region
              $region59: #{a_call__.1} parent=39 // pred_check
                _
              $region60: #{a_call__.1} parent=39 // pred_check_branch
                %446 = sbr.rel (0) target = $region62
              $region61: #{a_call__.1} parent=39 // pred_region
                %s447 = sdiv.u32.pop %s371, 9
                %s448 = srem.u32.pop %s371, 9
                // While loop
                $region63: #{a_call__.1} parent=61 // loop_pre_header
                  _
                $region64: #{a_call__.1} parent=61 // loop_header
                  %s450 = sphi 0, %s452
                  %p451 = scmp.ge.s32.totalorder %s450, %s447
                  %s455 = sphi 0, %s478
                  %s456 = sphi %s364, %s481
                  %s457 = sphi %s375, %s482
                $region65: #{a_call__.1} parent=61 // loop_header_branch
                  %454 = sbr.rel (%p451) target = $region69
                $region66: #{a_call__.1} parent=61 // loop_body
                  %v458 = vld [vmem:[%s456] sm:$0xff]
                  %459 = vst [vmem:[%s457] sm:$0xff] %v458
                  %v460 = vld [vmem:[%s456 + $0x8] sm:$0xff]
                  %461 = vst [vmem:[%s457 + $0x8] sm:$0xff] %v460
                  %v462 = vld [vmem:[%s456 + $0x10] sm:$0xff]
                  %463 = vst [vmem:[%s457 + $0x10] sm:$0xff] %v462
                  %v464 = vld [vmem:[%s456 + $0x18] sm:$0xff]
                  %465 = vst [vmem:[%s457 + $0x18] sm:$0xff] %v464
                  %v466 = vld [vmem:[%s456 + $0x20] sm:$0xff]
                  %467 = vst [vmem:[%s457 + $0x20] sm:$0xff] %v466
                  %v468 = vld [vmem:[%s456 + $0x28] sm:$0xff]
                  %469 = vst [vmem:[%s457 + $0x28] sm:$0xff] %v468
                  %v470 = vld [vmem:[%s456 + $0x30] sm:$0xff]
                  %471 = vst [vmem:[%s457 + $0x30] sm:$0xff] %v470
                  %v472 = vld [vmem:[%s456 + $0x38] sm:$0xff]
                  %473 = vst [vmem:[%s457 + $0x38] sm:$0xff] %v472
                  %v474 = vld [vmem:[%s456 + $0x40] sm:$0xff]
                  %475 = vst [vmem:[%s457 + $0x40] sm:$0xff] %v474
                  %s476 = sadd.s32 1, %s455
                  %p477 = scmp.ge.s32.totalorder %s476, %s447
                  %s478 = scalar_select %p477, 0, %s476
                  %s479 = smul.u32 %s478, 72
                  %s480 = smul.u32 %s478, 72
                  %s481 = scalar_lea.vmem %s364, %s479 [#allocation2]
                  %s482 = scalar_lea.vmem %s375, %s480
                $region67: #{a_call__.1} parent=61 // loop_footer
                  %s452 = sadd.s32 %s450, 1
                $region68: #{a_call__.1} parent=61 // loop_footer_branch
                  %449 = sbr.rel target = $region64
                $region69: #{a_call__.1} parent=61 // loop_exit
                  _
                %s483 = sdiv.u32.pop %s371, 9
                %s484 = srem.u32.pop %s371, 9
                %s485 = smul.u32 %s483, 9
                %s486 = smul.u32 8, %s485
                %s487 = scalar_lea.vmem %s364, %s486 [#allocation2]
                %s488 = smul.u32 8, %s485
                %s489 = scalar_lea.vmem %s375, %s488
                // While loop
                $region70: #{a_call__.1} parent=61 // loop_pre_header
                  _
                $region71: #{a_call__.1} parent=61 // loop_header
                  %s491 = sphi 0, %s493
                  %p492 = scmp.ge.s32.totalorder %s491, %s484
                  %s496 = sphi 0, %s503
                  %s497 = sphi %s487, %s506
                  %s498 = sphi %s489, %s507
                $region72: #{a_call__.1} parent=61 // loop_header_branch
                  %495 = sbr.rel (%p492) target = $region76
                $region73: #{a_call__.1} parent=61 // loop_body
                  %v499 = vld [vmem:[%s497] sm:$0xff]
                  %500 = vst [vmem:[%s498] sm:$0xff] %v499
                  %s501 = sadd.s32 1, %s496
                  %p502 = scmp.ge.s32.totalorder %s501, %s484
                  %s503 = scalar_select %p502, 0, %s501
                  %s504 = smul.u32 %s503, 8
                  %s505 = smul.u32 %s503, 8
                  %s506 = scalar_lea.vmem %s487, %s504 [#allocation2]
                  %s507 = scalar_lea.vmem %s489, %s505
                $region74: #{a_call__.1} parent=61 // loop_footer
                  %s493 = sadd.s32 %s491, 1
                $region75: #{a_call__.1} parent=61 // loop_footer_branch
                  %490 = sbr.rel target = $region71
                $region76: #{a_call__.1} parent=61 // loop_exit
                  _
              $region62: #{a_call__.1} parent=39 // pred_fallthru
                _
              // Predicated region
              $region77: #{a_call__.1} parent=39 // pred_check
                _
              $region78: #{a_call__.1} parent=39 // pred_check_branch
                %509 = sbr.rel target = $region80
              $region79: #{a_call__.1} parent=39 // pred_region
                _
              $region80: #{a_call__.1} parent=39 // pred_fallthru
                _
            $region40: #{a_call__.1} parent=35 // pred_fallthru
              _
            // Predicated region
            $region41: #{a_call__.1} parent=35 // pred_check
              _
            $region42: #{a_call__.1} parent=35 // pred_check_branch
              %382 = sbr.rel target = $region44
            $region43: #{a_call__.1} parent=35 // pred_region
              %s384 = sdiv.u32.pop %s371, 9
              %s385 = srem.u32.pop %s371, 9
              // While loop
              $region45: #{a_call__.1} parent=43 // loop_pre_header
                _
              $region46: #{a_call__.1} parent=43 // loop_header
                %s387 = sphi 0, %s389
                %p388 = scmp.ge.s32.totalorder %s387, %s384
                %s392 = sphi 0, %s415
                %s393 = sphi %s364, %s418
                %s394 = sphi %s375, %s419
              $region47: #{a_call__.1} parent=43 // loop_header_branch
                %391 = sbr.rel (%p388) target = $region51
              $region48: #{a_call__.1} parent=43 // loop_body
                %v395 = vld [vmem:[%s393] sm:$0xff]
                %396 = vst [vmem:[%s394] sm:$0xff] %v395
                %v397 = vld [vmem:[%s393 + $0x8] sm:$0xff]
                %398 = vst [vmem:[%s394 + $0x8] sm:$0xff] %v397
                %v399 = vld [vmem:[%s393 + $0x10] sm:$0xff]
                %400 = vst [vmem:[%s394 + $0x10] sm:$0xff] %v399
                %v401 = vld [vmem:[%s393 + $0x18] sm:$0xff]
                %402 = vst [vmem:[%s394 + $0x18] sm:$0xff] %v401
                %v403 = vld [vmem:[%s393 + $0x20] sm:$0xff]
                %404 = vst [vmem:[%s394 + $0x20] sm:$0xff] %v403
                %v405 = vld [vmem:[%s393 + $0x28] sm:$0xff]
                %406 = vst [vmem:[%s394 + $0x28] sm:$0xff] %v405
                %v407 = vld [vmem:[%s393 + $0x30] sm:$0xff]
                %408 = vst [vmem:[%s394 + $0x30] sm:$0xff] %v407
                %v409 = vld [vmem:[%s393 + $0x38] sm:$0xff]
                %410 = vst [vmem:[%s394 + $0x38] sm:$0xff] %v409
                %v411 = vld [vmem:[%s393 + $0x40] sm:$0xff]
                %412 = vst [vmem:[%s394 + $0x40] sm:$0xff] %v411
                %s413 = sadd.s32 1, %s392
                %p414 = scmp.ge.s32.totalorder %s413, %s384
                %s415 = scalar_select %p414, 0, %s413
                %s416 = smul.u32 %s415, 72
                %s417 = smul.u32 %s415, 72
                %s418 = scalar_lea.vmem %s364, %s416 [#allocation2]
                %s419 = scalar_lea.vmem %s375, %s417
              $region49: #{a_call__.1} parent=43 // loop_footer
                %s389 = sadd.s32 %s387, 1
              $region50: #{a_call__.1} parent=43 // loop_footer_branch
                %386 = sbr.rel target = $region46
              $region51: #{a_call__.1} parent=43 // loop_exit
                _
              %s420 = sdiv.u32.pop %s371, 9
              %s421 = srem.u32.pop %s371, 9
              %s422 = smul.u32 %s420, 9
              %s423 = smul.u32 8, %s422
              %s424 = scalar_lea.vmem %s364, %s423 [#allocation2]
              %s425 = smul.u32 8, %s422
              %s426 = scalar_lea.vmem %s375, %s425
              // While loop
              $region52: #{a_call__.1} parent=43 // loop_pre_header
                _
              $region53: #{a_call__.1} parent=43 // loop_header
                %s428 = sphi 0, %s430
                %p429 = scmp.ge.s32.totalorder %s428, %s421
                %s433 = sphi 0, %s440
                %s434 = sphi %s424, %s443
                %s435 = sphi %s426, %s444
              $region54: #{a_call__.1} parent=43 // loop_header_branch
                %432 = sbr.rel (%p429) target = $region58
              $region55: #{a_call__.1} parent=43 // loop_body
                %v436 = vld [vmem:[%s434] sm:$0xff]
                %437 = vst [vmem:[%s435] sm:$0xff] %v436
                %s438 = sadd.s32 1, %s433
                %p439 = scmp.ge.s32.totalorder %s438, %s421
                %s440 = scalar_select %p439, 0, %s438
                %s441 = smul.u32 %s440, 8
                %s442 = smul.u32 %s440, 8
                %s443 = scalar_lea.vmem %s424, %s441 [#allocation2]
                %s444 = scalar_lea.vmem %s426, %s442
              $region56: #{a_call__.1} parent=43 // loop_footer
                %s430 = sadd.s32 %s428, 1
              $region57: #{a_call__.1} parent=43 // loop_footer_branch
                %427 = sbr.rel target = $region53
              $region58: #{a_call__.1} parent=43 // loop_exit
                _
            $region44: #{a_call__.1} parent=35 // pred_fallthru
              _
          $region36: #{a_call__.1} parent=31 // pred_fallthru
            _
          %510 = vnop
        $region32: #{a_call__.1} parent=27 // pred_fallthru
          _
      $region28: #{a_call__.1} parent=5 // pred_fallthru
        _
      %p511 = scmp.le.s32.totalorder 2, %s8
      // Predicated region
      $region81: #{a_call__.1} parent=5 // pred_check
        %p512 = pneg %p511
      $region82: #{a_call__.1} parent=5 // pred_check_branch
        %514 = sbr.rel (%p512) target = $region84
      $region83: #{a_call__.1} parent=5 // pred_region
        %s515 = ssub.s32 %s8, 2
        // Predicated region
        $region85: #{a_call__.1} parent=83 // pred_check
          %p516 = pneg %p84
        $region86: #{a_call__.1} parent=83 // pred_check_branch
          %518 = sbr.rel (%p516) target = $region88
        $region87: #{a_call__.1} parent=83 // pred_region
          %s519 = sand.u32 %s69, 1
          %s520 = sand.u32 %s69, 1
          %s521 = smul.addr %s520, 72
          %s522 = scalar_lea.vmem [#allocation2], %s521
        $region88: #{a_call__.1} parent=83 // pred_fallthru
          _
      $region84: #{a_call__.1} parent=5 // pred_fallthru
        _
    $region6: #{a_call__.1} parent=1 // loop_footer
      %s12 = sadd.s32 1, %s8
    $region7: #{a_call__.1} parent=1 // loop_footer_branch
      %7 = sbr.rel target = $region3
    $region8: #{a_call__.1} parent=1 // loop_exit
      _

</llo_original>
